<compile_context>
chip_gen: v5e
topology: v5e:2x2
jax: 0.10.0
libtpu: 0.0.40
codegen_flags: <defaults>
</compile_context>

<pallas_src>
import jax
import jax.numpy as jnp
from jax.experimental import pallas as pl
from jax.experimental.pallas import tpu as pltpu

LANE = 128
SUBLANE_BF16 = 16  # bf16 packs 2 rows / sublane


def _round_up(x, m):
    return ((x + m - 1) // m) * m


# --------------------------------------------------------------------------
# Kernel
# --------------------------------------------------------------------------
def mlp_kernel(x_ref, w1_ref, b1_ref, w2_ref, b2_ref, w3_ref, b3_ref, w4_ref,
               o_ref):
    # Layer 1: Linear (bf16 MXU, f32 accumulate) + bias + ReLU (f32 VPU).
    h = jnp.dot(x_ref[...], w1_ref[...], preferred_element_type=jnp.float32)
    h = jnp.maximum(h + b1_ref[...], 0.0).astype(x_ref.dtype)
    # Layer 2
    h = jnp.dot(h, w2_ref[...], preferred_element_type=jnp.float32)
    h = jnp.maximum(h + b2_ref[...], 0.0).astype(x_ref.dtype)
    # Layer 3
    h = jnp.dot(h, w3_ref[...], preferred_element_type=jnp.float32)
    h = jnp.maximum(h + b3_ref[...], 0.0).astype(x_ref.dtype)
    # Layer 4: Linear, no bias.
    o_ref[...] = jnp.dot(h, w4_ref[...],
                         preferred_element_type=jnp.float32).astype(o_ref.dtype)


# --------------------------------------------------------------------------
# One-time parameter preparation (pad lane dims to 128, cast to bf16).
# --------------------------------------------------------------------------
def prepare_params(params, compute_dtype=jnp.bfloat16):
    """Pad + cast weights once; reuse the result across forward calls."""
    in_f, hidden = params["w1"].shape
    num_classes = params["w4"].shape[1]
    in_p = _round_up(in_f, LANE)
    hid_p = _round_up(hidden, LANE)
    out_p = _round_up(num_classes, LANE)

    def pad2(a, rows, cols, dtype):
        return jnp.pad(a, ((0, rows - a.shape[0]),
                           (0, cols - a.shape[1]))).astype(dtype)

    padded = {
        "w1": pad2(params["w1"], in_p, hid_p, compute_dtype),
        "b1": pad2(params["b1"], 1, hid_p, jnp.float32),
        "w2": pad2(params["w2"], hid_p, hid_p, compute_dtype),
        "b2": pad2(params["b2"], 1, hid_p, jnp.float32),
        "w3": pad2(params["w3"], hid_p, hid_p, compute_dtype),
        "b3": pad2(params["b3"], 1, hid_p, jnp.float32),
        "w4": pad2(params["w4"], hid_p, out_p, compute_dtype),
    }
    meta = dict(in_features=in_f, hidden=hidden, num_classes=num_classes,
                in_p=in_p, hid_p=hid_p, out_p=out_p)
    return padded, meta


# --------------------------------------------------------------------------
# Batch-tile selection: balanced tiles that fit a conservative VMEM budget
# (sized for v7x's 64 MiB/TC), >= 2 tiles when B >= 32 so both v7x cores work.
# --------------------------------------------------------------------------
def _choose_batch_tile(B, in_p, hid_p, out_p, weight_bytes):
    BUDGET = 40 * 1024 * 1024  # conservative scoped-VMEM target (fits v7x)
    # Per batch-row VMEM: double-buffered bf16 x tile + f32 out tile, plus one
    # f32 intermediate of width hid_p.
    per_row = 2 * (in_p * 2 + out_p * 4) + hid_p * 4
    avail = max(BUDGET - weight_bytes, 2 * 1024 * 1024)
    cap = max(64, min(1024, (avail // per_row) // SUBLANE_BF16 * SUBLANE_BF16))
    n_tiles = max(2 if B >= 32 else 1, pl.cdiv(B, cap))
    tb = _round_up(pl.cdiv(B, n_tiles), SUBLANE_BF16)
    return tb, n_tiles, per_row


# --------------------------------------------------------------------------
# Forward
# --------------------------------------------------------------------------
def mlp_forward(x, padded, meta, *, compute_dtype=jnp.bfloat16):
    """x: (B, in_features) f32 -> (B, num_classes) f32."""
    B, in_f = x.shape
    assert in_f == meta["in_features"]
    in_p, hid_p, out_p = meta["in_p"], meta["hid_p"], meta["out_p"]
    num_classes = meta["num_classes"]

    # Single-buffered resident weight/bias footprint (bytes).
    weight_bytes = ((in_p * hid_p + 2 * hid_p * hid_p + hid_p * out_p) * 2
                    + 3 * hid_p * 4)
    TB, n_tiles, per_row = _choose_batch_tile(B, in_p, hid_p, out_p,
                                              weight_bytes)
    B_p = TB * n_tiles

    # Only the activations are padded/cast per call.
    x_p = jnp.pad(x, ((0, B_p - B), (0, in_p - in_f))).astype(compute_dtype)

    need = weight_bytes + TB * per_row
    vmem_limit = int(max(need * 1.3, 32 * 1024 * 1024))

    # Grid-invariant operands: constant index_map + single buffer.
    const = lambda shape: pl.BlockSpec(shape, lambda i: (0, 0),
                                       pipeline_mode=pl.Buffered(1))

    out = pl.pallas_call(
        mlp_kernel,
        out_shape=jax.ShapeDtypeStruct((B_p, out_p), jnp.float32),
        grid=(n_tiles,),
        in_specs=[
            pl.BlockSpec((TB, in_p), lambda i: (i, 0)),   # batch-tiled input
            const((in_p, hid_p)), const((1, hid_p)),      # weights/biases stay
            const((hid_p, hid_p)), const((1, hid_p)),     # resident in VMEM
            const((hid_p, hid_p)), const((1, hid_p)),     # across grid steps
            const((hid_p, out_p)),
        ],
        out_specs=pl.BlockSpec((TB, out_p), lambda i: (i, 0)),
        compiler_params=pltpu.CompilerParams(
            dimension_semantics=("parallel",),  # shard batch over v7x's 2 TCs
            vmem_limit_bytes=vmem_limit),
    )(x_p, padded["w1"], padded["b1"], padded["w2"], padded["b2"],
      padded["w3"], padded["b3"], padded["w4"])

    return out[:B, :num_classes]


# --------------------------------------------------------------------------
# Init (mimics PyTorch nn.Linear uniform ±1/sqrt(fan_in)) and f32 reference.
# --------------------------------------------------------------------------
def init_params(key, in_features, hidden_size, num_classes):
    ks = jax.random.split(key, 7)

    def lin(kw, kb, fan_in, fan_out, bias=True):
        bound = 1.0 / jnp.sqrt(fan_in)
        # Stored directly as (in, out) == PyTorch weight (out, in) transposed.
        w = jax.random.uniform(kw, (fan_in, fan_out), jnp.float32, -bound, bound)
        b = (jax.random.uniform(kb, (1, fan_out), jnp.float32, -bound, bound)
             if bias else None)
        return w, b

    w1, b1 = lin(ks[0], ks[1], in_features, hidden_size)
    w2, b2 = lin(ks[2], ks[3], hidden_size, hidden_size)
    w3, b3 = lin(ks[4], ks[5], hidden_size, hidden_size)
    w4, _ = lin(ks[6], ks[6], hidden_size, num_classes, bias=False)
    return {"w1": w1, "b1": b1, "w2": w2, "b2": b2,
            "w3": w3, "b3": b3, "w4": w4}


def mlp_reference(x, p):
    h = jnp.maximum(x @ p["w1"] + p["b1"], 0.0)
    h = jnp.maximum(h @ p["w2"] + p["b2"], 0.0)
    h = jnp.maximum(h @ p["w3"] + p["b3"], 0.0)
    return h @ p["w4"]


if __name__ == "__main__":
    batch = 8
    in_features = 32
    hidden_size = 32
    num_classes = 4  # np.unique(y).shape[0] in the original script

    key = jax.random.PRNGKey(0)
    kx, kp = jax.random.split(key)
    x = jax.random.normal(kx, (batch, in_features), jnp.float32)
    params = init_params(kp, in_features, hidden_size, num_classes)

    # Pad/cast weights ONCE; reuse across calls.
    padded, meta = prepare_params(params)
    padded = jax.block_until_ready(padded)

    out = mlp_forward(x, padded, meta)
    out = jax.block_until_ready(out)

    ref = mlp_reference(x, params)
    assert out.shape == (batch, num_classes)
    # bf16 weights/activations with f32 accumulation vs pure-f32 reference.
    assert jnp.allclose(out, ref, atol=2e-2, rtol=2e-2), (
        jnp.max(jnp.abs(out - ref)))

    print("KERNEL_OK")
</pallas_src>

<mosaic_0001>
module attributes {stable_mosaic.version = 11 : i64} {
  func.func @mlp_kernel(%arg0: i32, %arg1: memref<16x128xbf16, #tpu.memory_space<vmem>>, %arg2: memref<128x128xbf16, #tpu.memory_space<vmem>>, %arg3: memref<1x128xf32, #tpu.memory_space<vmem>>, %arg4: memref<128x128xbf16, #tpu.memory_space<vmem>>, %arg5: memref<1x128xf32, #tpu.memory_space<vmem>>, %arg6: memref<128x128xbf16, #tpu.memory_space<vmem>>, %arg7: memref<1x128xf32, #tpu.memory_space<vmem>>, %arg8: memref<128x128xbf16, #tpu.memory_space<vmem>>, %arg9: memref<16x128xf32, #tpu.memory_space<vmem>>) attributes {dimension_semantics = [#tpu.dimension_semantics<parallel>], iteration_bounds = array<i64: 1>, scalar_prefetch = 0 : i64, scratch_operands = 0 : i64, tpu.core_type = #tpu.core_type<tc>, window_params = [{transform_indices = @transform_0, window_bounds = array<i64: 16, 128>}, {pipeline_mode = #tpu.pipeline_mode<synchronous>, transform_indices = @transform_1, window_bounds = array<i64: 128, 128>}, {pipeline_mode = #tpu.pipeline_mode<synchronous>, transform_indices = @transform_2, window_bounds = array<i64: 1, 128>}, {pipeline_mode = #tpu.pipeline_mode<synchronous>, transform_indices = @transform_3, window_bounds = array<i64: 128, 128>}, {pipeline_mode = #tpu.pipeline_mode<synchronous>, transform_indices = @transform_4, window_bounds = array<i64: 1, 128>}, {pipeline_mode = #tpu.pipeline_mode<synchronous>, transform_indices = @transform_5, window_bounds = array<i64: 128, 128>}, {pipeline_mode = #tpu.pipeline_mode<synchronous>, transform_indices = @transform_6, window_bounds = array<i64: 1, 128>}, {pipeline_mode = #tpu.pipeline_mode<synchronous>, transform_indices = @transform_7, window_bounds = array<i64: 128, 128>}, {transform_indices = @transform_8, window_bounds = array<i64: 16, 128>}]} {
    %c0 = arith.constant 0 : index
    %c0_0 = arith.constant 0 : index
    %0 = vector.load %arg1[%c0, %c0_0] : memref<16x128xbf16, #tpu.memory_space<vmem>>, vector<16x128xbf16>
    %c0_1 = arith.constant 0 : index
    %c0_2 = arith.constant 0 : index
    %1 = vector.load %arg2[%c0_1, %c0_2] : memref<128x128xbf16, #tpu.memory_space<vmem>>, vector<128x128xbf16>
    %cst = arith.constant dense<0.000000e+00> : vector<16x128xf32>
    %2 = tpu.matmul %0, %1, %cst {dimension_numbers = #tpu.dot_dimension_numbers<[1], [0], [0], [1], [0, 0, 1, 1], [], []>} : vector<16x128xbf16>, vector<128x128xbf16>, vector<16x128xf32> -> vector<16x128xf32>
    %c0_3 = arith.constant 0 : index
    %c0_4 = arith.constant 0 : index
    %3 = vector.load %arg3[%c0_3, %c0_4] : memref<1x128xf32, #tpu.memory_space<vmem>>, vector<1x128xf32>
    %4 = vector.broadcast %3 : vector<1x128xf32> to vector<16x128xf32>
    %5 = arith.addf %2, %4 : vector<16x128xf32>
    %cst_5 = arith.constant 0.000000e+00 : f32
    %6 = vector.broadcast %cst_5 : f32 to vector<16x128xf32>
    %7 = arith.maximumf %5, %6 : vector<16x128xf32>
    %8 = arith.truncf %7 : vector<16x128xf32> to vector<16x128xbf16>
    %c0_6 = arith.constant 0 : index
    %c0_7 = arith.constant 0 : index
    %9 = vector.load %arg4[%c0_6, %c0_7] : memref<128x128xbf16, #tpu.memory_space<vmem>>, vector<128x128xbf16>
    %cst_8 = arith.constant dense<0.000000e+00> : vector<16x128xf32>
    %10 = tpu.matmul %8, %9, %cst_8 {dimension_numbers = #tpu.dot_dimension_numbers<[1], [0], [0], [1], [0, 0, 1, 1], [], []>} : vector<16x128xbf16>, vector<128x128xbf16>, vector<16x128xf32> -> vector<16x128xf32>
    %c0_9 = arith.constant 0 : index
    %c0_10 = arith.constant 0 : index
    %11 = vector.load %arg5[%c0_9, %c0_10] : memref<1x128xf32, #tpu.memory_space<vmem>>, vector<1x128xf32>
    %12 = vector.broadcast %11 : vector<1x128xf32> to vector<16x128xf32>
    %13 = arith.addf %10, %12 : vector<16x128xf32>
    %cst_11 = arith.constant 0.000000e+00 : f32
    %14 = vector.broadcast %cst_11 : f32 to vector<16x128xf32>
    %15 = arith.maximumf %13, %14 : vector<16x128xf32>
    %16 = arith.truncf %15 : vector<16x128xf32> to vector<16x128xbf16>
    %c0_12 = arith.constant 0 : index
    %c0_13 = arith.constant 0 : index
    %17 = vector.load %arg6[%c0_12, %c0_13] : memref<128x128xbf16, #tpu.memory_space<vmem>>, vector<128x128xbf16>
    %cst_14 = arith.constant dense<0.000000e+00> : vector<16x128xf32>
    %18 = tpu.matmul %16, %17, %cst_14 {dimension_numbers = #tpu.dot_dimension_numbers<[1], [0], [0], [1], [0, 0, 1, 1], [], []>} : vector<16x128xbf16>, vector<128x128xbf16>, vector<16x128xf32> -> vector<16x128xf32>
    %c0_15 = arith.constant 0 : index
    %c0_16 = arith.constant 0 : index
    %19 = vector.load %arg7[%c0_15, %c0_16] : memref<1x128xf32, #tpu.memory_space<vmem>>, vector<1x128xf32>
    %20 = vector.broadcast %19 : vector<1x128xf32> to vector<16x128xf32>
    %21 = arith.addf %18, %20 : vector<16x128xf32>
    %cst_17 = arith.constant 0.000000e+00 : f32
    %22 = vector.broadcast %cst_17 : f32 to vector<16x128xf32>
    %23 = arith.maximumf %21, %22 : vector<16x128xf32>
    %24 = arith.truncf %23 : vector<16x128xf32> to vector<16x128xbf16>
    %c0_18 = arith.constant 0 : index
    %c0_19 = arith.constant 0 : index
    %25 = vector.load %arg8[%c0_18, %c0_19] : memref<128x128xbf16, #tpu.memory_space<vmem>>, vector<128x128xbf16>
    %cst_20 = arith.constant dense<0.000000e+00> : vector<16x128xf32>
    %26 = tpu.matmul %24, %25, %cst_20 {dimension_numbers = #tpu.dot_dimension_numbers<[1], [0], [0], [1], [0, 0, 1, 1], [], []>} : vector<16x128xbf16>, vector<128x128xbf16>, vector<16x128xf32> -> vector<16x128xf32>
    %c0_21 = arith.constant 0 : index
    %c0_22 = arith.constant 0 : index
    %27 = vector.load %arg9[%c0_21, %c0_22] : memref<16x128xf32, #tpu.memory_space<vmem>>, vector<16x128xf32>
    tpu.vector_store %arg9[%c0_21, %c0_22], %26 {strides = array<i32>} : memref<16x128xf32, #tpu.memory_space<vmem>>, vector<16x128xf32>,
    return
  }
  func.func @transform_0(%arg0: i32) -> (i32, i32) {
    %c0_i32 = arith.constant 0 : i32
    %c0_i32_0 = arith.constant 0 : i32
    return %arg0, %c0_i32 : i32, i32
  }
  func.func @transform_1(%arg0: i32) -> (i32, i32) {
    %c0_i32 = arith.constant 0 : i32
    %c0_i32_0 = arith.constant 0 : i32
    %c0_i32_1 = arith.constant 0 : i32
    return %c0_i32, %c0_i32_0 : i32, i32
  }
  func.func @transform_2(%arg0: i32) -> (i32, i32) {
    %c0_i32 = arith.constant 0 : i32
    %c0_i32_0 = arith.constant 0 : i32
    %c0_i32_1 = arith.constant 0 : i32
    return %c0_i32, %c0_i32_0 : i32, i32
  }
  func.func @transform_3(%arg0: i32) -> (i32, i32) {
    %c0_i32 = arith.constant 0 : i32
    %c0_i32_0 = arith.constant 0 : i32
    %c0_i32_1 = arith.constant 0 : i32
    return %c0_i32, %c0_i32_0 : i32, i32
  }
  func.func @transform_4(%arg0: i32) -> (i32, i32) {
    %c0_i32 = arith.constant 0 : i32
    %c0_i32_0 = arith.constant 0 : i32
    %c0_i32_1 = arith.constant 0 : i32
    return %c0_i32, %c0_i32_0 : i32, i32
  }
  func.func @transform_5(%arg0: i32) -> (i32, i32) {
    %c0_i32 = arith.constant 0 : i32
    %c0_i32_0 = arith.constant 0 : i32
    %c0_i32_1 = arith.constant 0 : i32
    return %c0_i32, %c0_i32_0 : i32, i32
  }
  func.func @transform_6(%arg0: i32) -> (i32, i32) {
    %c0_i32 = arith.constant 0 : i32
    %c0_i32_0 = arith.constant 0 : i32
    %c0_i32_1 = arith.constant 0 : i32
    return %c0_i32, %c0_i32_0 : i32, i32
  }
  func.func @transform_7(%arg0: i32) -> (i32, i32) {
    %c0_i32 = arith.constant 0 : i32
    %c0_i32_0 = arith.constant 0 : i32
    %c0_i32_1 = arith.constant 0 : i32
    return %c0_i32, %c0_i32_0 : i32, i32
  }
  func.func @transform_8(%arg0: i32) -> (i32, i32) {
    %c0_i32 = arith.constant 0 : i32
    %c0_i32_0 = arith.constant 0 : i32
    return %arg0, %c0_i32 : i32, i32
  }
}

</mosaic_0001>

<llo_original>
// kernel: tpu_custom_call.1
$region0: #{tpu_custom_call.1}
  #allocation0 [shape = 'u32[]', space=smem, size = 0x4, offset = 0x4, fixed_abs, tag = 'smem constant byte address 0x4 - core index']
  #allocation1 [shape = 'u32[72,128]{1,0:T(1,128)}', space=vmem, size = 0x9000, scoped, tag = 'internal scratch']
  %s0 = inlined_call_operand.hbm [shape: bf16[16,128], index: 0, kind: input, shape index: {}]
  %s1 = inlined_call_operand.hbm [shape: bf16[128,128], index: 1, kind: input, shape index: {}]
  %s2 = inlined_call_operand.vmem [shape: f32[1,128], index: 2, kind: input, shape index: {}]
  %s3 = inlined_call_operand.hbm [shape: bf16[128,128], index: 3, kind: input, shape index: {}]
  %s4 = inlined_call_operand.vmem [shape: f32[1,128], index: 4, kind: input, shape index: {}]
  %s5 = inlined_call_operand.hbm [shape: bf16[128,128], index: 5, kind: input, shape index: {}]
  %s6 = inlined_call_operand.vmem [shape: f32[1,128], index: 6, kind: input, shape index: {}]
  %s7 = inlined_call_operand.hbm [shape: bf16[128,128], index: 7, kind: input, shape index: {}]
  %s8 = inlined_call_operand.hbm [shape: f32[16,128], index: 8, kind: output, shape index: {}]
  %s9 = sld [smem:[#allocation0]]
  $region62: #{tpu_custom_call.1} parent=0
    _
  %s11 = ssub.s32 1, %s9
  %s12 = scalar_select 0, %s11, %s9
  $region1: #{tpu_custom_call.1} parent=0
    #allocation2 [shape = 'u8[4096]{0}', space=vmem, size = 0x1000, scoped, tag = 'input window, operand 0, single buffered']
    #allocation3 [shape = 's32[1]{0}', space=sflag, size = 0x4, scoped, tag = 'scoped memory for tpu_custom_call.1']
    #allocation4 [shape = 's32[1]{0}', space=sflag, size = 0x4, scoped, tag = 'scoped memory for tpu_custom_call.1']
    #allocation5 [shape = 'u8[32768]{0}', space=vmem, size = 0x8000, scoped, tag = 'input window, operand 1, single buffered']
    #allocation6 [shape = 's32[1]{0}', space=sflag, size = 0x4, scoped, tag = 'scoped memory for tpu_custom_call.1']
    #allocation7 [shape = 'u8[32768]{0}', space=vmem, size = 0x8000, scoped, tag = 'input window, operand 3, single buffered']
    #allocation8 [shape = 'u8[32768]{0}', space=vmem, size = 0x8000, scoped, tag = 'input window, operand 5, single buffered']
    #allocation9 [shape = 's32[1]{0}', space=sflag, size = 0x4, scoped, tag = 'scoped memory for tpu_custom_call.1']
    #allocation10 [shape = 'u8[32768]{0}', space=vmem, size = 0x8000, scoped, tag = 'input window, operand 7, single buffered']
    #allocation11 [shape = 'u8[8192]{0}', space=vmem, size = 0x2000, scoped, tag = 'output window, operand 0, single buffered']
    %13 = vsyncpa [#allocation3], 0
    %14 = vsyncpa [#allocation6], 0
    %15 = vsyncpa [#allocation9], 0
    %16 = vsyncpa [#allocation4], 0
    // Predicated region
    $region2: #{tpu_custom_call.1} parent=1 // pred_check
      _
    $region3: #{tpu_custom_call.1} parent=1 // pred_check_branch
      %18 = sbr.rel (0) target = $region5
    $region4: #{tpu_custom_call.1} parent=1 // pred_region
      %20 = vsyncadd [#allocation3], 0
      %s21 = sshll.u32 %s0, 4
      %s22 = int_to_ptr.hbm [resolvable:$true] %s21
      %s23 = sshll.u32 [#allocation2], 4
      %s24 = int_to_ptr.vmem [resolvable:$true] %s23
      %29 = dma.hbm_to_vmem [thread:$0]  %s22, 128, %s24, [#allocation3], 64, 64, 4
    $region5: #{tpu_custom_call.1} parent=1 // pred_fallthru
      _
    // Predicated region
    $region6: #{tpu_custom_call.1} parent=1 // pred_check
      _
    $region7: #{tpu_custom_call.1} parent=1 // pred_check_branch
      %31 = sbr.rel (0) target = $region9
    $region8: #{tpu_custom_call.1} parent=1 // pred_region
      %33 = vsyncadd [#allocation6], 0
      %s34 = sshll.u32 %s1, 4
      %s35 = int_to_ptr.hbm [resolvable:$true] %s34
      %s36 = sshll.u32 [#allocation5], 4
      %s37 = int_to_ptr.vmem [resolvable:$true] %s36
      %42 = dma.hbm_to_vmem [thread:$0]  %s35, 1024, %s37, [#allocation6], 64, 64, 4
    $region9: #{tpu_custom_call.1} parent=1 // pred_fallthru
      _
    // Predicated region
    $region10: #{tpu_custom_call.1} parent=1 // pred_check
      _
    $region11: #{tpu_custom_call.1} parent=1 // pred_check_branch
      %44 = sbr.rel (0) target = $region13
    $region12: #{tpu_custom_call.1} parent=1 // pred_region
      _
    $region13: #{tpu_custom_call.1} parent=1 // pred_fallthru
      _
    // Predicated region
    $region14: #{tpu_custom_call.1} parent=1 // pred_check
      _
    $region15: #{tpu_custom_call.1} parent=1 // pred_check_branch
      %46 = sbr.rel (0) target = $region17
    $region16: #{tpu_custom_call.1} parent=1 // pred_region
      %48 = vsyncadd [#allocation6], 0
      %s49 = sshll.u32 %s3, 4
      %s50 = int_to_ptr.hbm [resolvable:$true] %s49
      %s51 = sshll.u32 [#allocation7], 4
      %s52 = int_to_ptr.vmem [resolvable:$true] %s51
      %57 = dma.hbm_to_vmem [thread:$0]  %s50, 1024, %s52, [#allocation6], 64, 64, 4
    $region17: #{tpu_custom_call.1} parent=1 // pred_fallthru
      _
    // Predicated region
    $region18: #{tpu_custom_call.1} parent=1 // pred_check
      _
    $region19: #{tpu_custom_call.1} parent=1 // pred_check_branch
      %59 = sbr.rel (0) target = $region21
    $region20: #{tpu_custom_call.1} parent=1 // pred_region
      _
    $region21: #{tpu_custom_call.1} parent=1 // pred_fallthru
      _
    // Predicated region
    $region22: #{tpu_custom_call.1} parent=1 // pred_check
      _
    $region23: #{tpu_custom_call.1} parent=1 // pred_check_branch
      %61 = sbr.rel (0) target = $region25
    $region24: #{tpu_custom_call.1} parent=1 // pred_region
      %63 = vsyncadd [#allocation9], 0
      %s64 = sshll.u32 %s5, 4
      %s65 = int_to_ptr.hbm [resolvable:$true] %s64
      %s66 = sshll.u32 [#allocation8], 4
      %s67 = int_to_ptr.vmem [resolvable:$true] %s66
      %72 = dma.hbm_to_vmem [thread:$0]  %s65, 1024, %s67, [#allocation9], 64, 64, 4
    $region25: #{tpu_custom_call.1} parent=1 // pred_fallthru
      _
    // Predicated region
    $region26: #{tpu_custom_call.1} parent=1 // pred_check
      _
    $region27: #{tpu_custom_call.1} parent=1 // pred_check_branch
      %74 = sbr.rel (0) target = $region29
    $region28: #{tpu_custom_call.1} parent=1 // pred_region
      _
    $region29: #{tpu_custom_call.1} parent=1 // pred_fallthru
      _
    // Predicated region
    $region30: #{tpu_custom_call.1} parent=1 // pred_check
      _
    $region31: #{tpu_custom_call.1} parent=1 // pred_check_branch
      %76 = sbr.rel (0) target = $region33
    $region32: #{tpu_custom_call.1} parent=1 // pred_region
      %78 = vsyncadd [#allocation9], 0
      %s79 = sshll.u32 %s7, 4
      %s80 = int_to_ptr.hbm [resolvable:$true] %s79
      %s81 = sshll.u32 [#allocation10], 4
      %s82 = int_to_ptr.vmem [resolvable:$true] %s81
      %87 = dma.hbm_to_vmem [thread:$0]  %s80, 1024, %s82, [#allocation9], 64, 64, 4
    $region33: #{tpu_custom_call.1} parent=1 // pred_fallthru
      _
    // Predicated region
    $region34: #{tpu_custom_call.1} parent=1 // pred_check
      _
    $region35: #{tpu_custom_call.1} parent=1 // pred_check_branch
      %89 = sbr.rel (0) target = $region37
    $region36: #{tpu_custom_call.1} parent=1 // pred_region
      %91 = dma.done [#allocation3], 128
    $region37: #{tpu_custom_call.1} parent=1 // pred_fallthru
      _
    // Predicated region
    $region38: #{tpu_custom_call.1} parent=1 // pred_check
      _
    $region39: #{tpu_custom_call.1} parent=1 // pred_check_branch
      %93 = sbr.rel (0) target = $region41
    $region40: #{tpu_custom_call.1} parent=1 // pred_region
      %95 = dma.done [#allocation6], 1024
    $region41: #{tpu_custom_call.1} parent=1 // pred_fallthru
      _
    // Predicated region
    $region42: #{tpu_custom_call.1} parent=1 // pred_check
      _
    $region43: #{tpu_custom_call.1} parent=1 // pred_check_branch
      %97 = sbr.rel (0) target = $region45
    $region44: #{tpu_custom_call.1} parent=1 // pred_region
      %99 = dma.done [#allocation6], 1024
    $region45: #{tpu_custom_call.1} parent=1 // pred_fallthru
      _
    // Predicated region
    $region46: #{tpu_custom_call.1} parent=1 // pred_check
      _
    $region47: #{tpu_custom_call.1} parent=1 // pred_check_branch
      %101 = sbr.rel (0) target = $region49
    $region48: #{tpu_custom_call.1} parent=1 // pred_region
      %103 = dma.done [#allocation9], 1024
    $region49: #{tpu_custom_call.1} parent=1 // pred_fallthru
      _
    // Predicated region
    $region50: #{tpu_custom_call.1} parent=1 // pred_check
      _
    $region51: #{tpu_custom_call.1} parent=1 // pred_check_branch
      %105 = sbr.rel (0) target = $region53
    $region52: #{tpu_custom_call.1} parent=1 // pred_region
      %107 = dma.done [#allocation9], 1024
    $region53: #{tpu_custom_call.1} parent=1 // pred_fallthru
      _
    %v108 = vld [vmem:[#allocation2] sm:$0xf]
    %v109 = vld [vmem:[#allocation2 + $0x4] sm:$0xf]
    %v110 = vld [vmem:[#allocation5] sm:$0xf]
    %v111 = vld [vmem:[#allocation5 + $0x4] sm:$0xf]
    %v112 = vld [vmem:[#allocation5 + $0x8] sm:$0xf]
    %v113 = vld [vmem:[#allocation5 + $0xc] sm:$0xf]
    %v114 = vld [vmem:[#allocation5 + $0x10] sm:$0xf]
    %v115 = vld [vmem:[#allocation5 + $0x14] sm:$0xf]
    %v116 = vld [vmem:[#allocation5 + $0x18] sm:$0xf]
    %v117 = vld [vmem:[#allocation5 + $0x1c] sm:$0xf]
    %v118 = vld [vmem:[#allocation5 + $0x20] sm:$0xf]
    %v119 = vld [vmem:[#allocation5 + $0x24] sm:$0xf]
    %v120 = vld [vmem:[#allocation5 + $0x28] sm:$0xf]
    %v121 = vld [vmem:[#allocation5 + $0x2c] sm:$0xf]
    %v122 = vld [vmem:[#allocation5 + $0x30] sm:$0xf]
    %v123 = vld [vmem:[#allocation5 + $0x34] sm:$0xf]
    %v124 = vld [vmem:[#allocation5 + $0x38] sm:$0xf]
    %v125 = vld [vmem:[#allocation5 + $0x3c] sm:$0xf]
    %v126 = vld [vmem:[%s2] sm:$0x1]
    %v128 = vperm.slane %v126, 0
    %v132 = vunpack.c.l.b16 %v108
    %v133 = vunpack.c.l.b16 %v109
    %v134 = vpack.c.b16 %v133, %v132
    %v152 = vunpack.c.l.b16 %v110
    %v153 = vunpack.c.l.b16 %v111
    %v154 = vunpack.c.l.b16 %v112
    %v155 = vunpack.c.l.b16 %v113
    %v156 = vunpack.c.l.b16 %v114
    %v157 = vunpack.c.l.b16 %v115
    %v158 = vunpack.c.l.b16 %v116
    %v159 = vunpack.c.l.b16 %v117
    %v160 = vunpack.c.l.b16 %v118
    %v161 = vunpack.c.l.b16 %v119
    %v162 = vunpack.c.l.b16 %v120
    %v163 = vunpack.c.l.b16 %v121
    %v164 = vunpack.c.l.b16 %v122
    %v165 = vunpack.c.l.b16 %v123
    %v166 = vunpack.c.l.b16 %v124
    %v167 = vunpack.c.l.b16 %v125
    %v168 = vpack.c.b16 %v153, %v152
    %v169 = vpack.c.b16 %v155, %v154
    %v170 = vpack.c.b16 %v157, %v156
    %v171 = vpack.c.b16 %v159, %v158
    %v172 = vpack.c.b16 %v161, %v160
    %v173 = vpack.c.b16 %v163, %v162
    %v174 = vpack.c.b16 %v165, %v164
    %v175 = vpack.c.b16 %v167, %v166
    %184 = vmatpush.bf16.msra.mxu0 %v175
    %185 = vmatpush.bf16.msra.mxu0 %v174
    %186 = vmatpush.bf16.msra.mxu0 %v173
    %187 = vmatpush.bf16.msra.mxu0 %v172
    %188 = vmatpush.bf16.msra.mxu0 %v171
    %189 = vmatpush.bf16.msra.mxu0 %v170
    %190 = vmatpush.bf16.msra.mxu0 %v169
    %191 = vmatpush.bf16.msra.mxu0 %v168
    %192 = vmatmul.bf16.gmra.mxu0 %v134
    %v193 = vpop.f32.mrf.mxu0
    %v194 = vadd.f32 %v128, %v193
    %v195 = vpop.f32.mrf.mxu0
    %v196 = vadd.f32 %v128, %v195
    %197 = vdwg.mxu0
    %v198 = vmax.f32 %v194, 0.0
    %v199 = vmax.f32 %v196, 0.0
    %v200 = vpack.c.bf16 %v199, %v198
    %v201 = vld [vmem:[#allocation7] sm:$0xf]
    %v202 = vld [vmem:[#allocation7 + $0x4] sm:$0xf]
    %v203 = vld [vmem:[#allocation7 + $0x8] sm:$0xf]
    %v204 = vld [vmem:[#allocation7 + $0xc] sm:$0xf]
    %v205 = vld [vmem:[#allocation7 + $0x10] sm:$0xf]
    %v206 = vld [vmem:[#allocation7 + $0x14] sm:$0xf]
    %v207 = vld [vmem:[#allocation7 + $0x18] sm:$0xf]
    %v208 = vld [vmem:[#allocation7 + $0x1c] sm:$0xf]
    %v209 = vld [vmem:[#allocation7 + $0x20] sm:$0xf]
    %v210 = vld [vmem:[#allocation7 + $0x24] sm:$0xf]
    %v211 = vld [vmem:[#allocation7 + $0x28] sm:$0xf]
    %v212 = vld [vmem:[#allocation7 + $0x2c] sm:$0xf]
    %v213 = vld [vmem:[#allocation7 + $0x30] sm:$0xf]
    %v214 = vld [vmem:[#allocation7 + $0x34] sm:$0xf]
    %v215 = vld [vmem:[#allocation7 + $0x38] sm:$0xf]
    %v216 = vld [vmem:[#allocation7 + $0x3c] sm:$0xf]
    %v217 = vld [vmem:[%s4] sm:$0x1]
    %v219 = vperm.slane %v217, 0
    %v237 = vunpack.c.l.b16 %v201
    %v238 = vunpack.c.l.b16 %v202
    %v239 = vunpack.c.l.b16 %v203
    %v240 = vunpack.c.l.b16 %v204
    %v241 = vunpack.c.l.b16 %v205
    %v242 = vunpack.c.l.b16 %v206
    %v243 = vunpack.c.l.b16 %v207
    %v244 = vunpack.c.l.b16 %v208
    %v245 = vunpack.c.l.b16 %v209
    %v246 = vunpack.c.l.b16 %v210
    %v247 = vunpack.c.l.b16 %v211
    %v248 = vunpack.c.l.b16 %v212
    %v249 = vunpack.c.l.b16 %v213
    %v250 = vunpack.c.l.b16 %v214
    %v251 = vunpack.c.l.b16 %v215
    %v252 = vunpack.c.l.b16 %v216
    %v253 = vpack.c.b16 %v238, %v237
    %v254 = vpack.c.b16 %v240, %v239
    %v255 = vpack.c.b16 %v242, %v241
    %v256 = vpack.c.b16 %v244, %v243
    %v257 = vpack.c.b16 %v246, %v245
    %v258 = vpack.c.b16 %v248, %v247
    %v259 = vpack.c.b16 %v250, %v249
    %v260 = vpack.c.b16 %v252, %v251
    %269 = vmatpush.bf16.msra.mxu0 %v260
    %270 = vmatpush.bf16.msra.mxu0 %v259
    %271 = vmatpush.bf16.msra.mxu0 %v258
    %272 = vmatpush.bf16.msra.mxu0 %v257
    %273 = vmatpush.bf16.msra.mxu0 %v256
    %274 = vmatpush.bf16.msra.mxu0 %v255
    %275 = vmatpush.bf16.msra.mxu0 %v254
    %276 = vmatpush.bf16.msra.mxu0 %v253
    %277 = vmatmul.bf16.gmra.mxu0 %v200
    %v278 = vpop.f32.mrf.mxu0
    %v279 = vadd.f32 %v219, %v278
    %v280 = vpop.f32.mrf.mxu0
    %v281 = vadd.f32 %v219, %v280
    %282 = vdwg.mxu0
    %v283 = vmax.f32 %v279, 0.0
    %v284 = vmax.f32 %v281, 0.0
    %v285 = vpack.c.bf16 %v284, %v283
    %v286 = vld [vmem:[#allocation8] sm:$0xf]
    %v287 = vld [vmem:[#allocation8 + $0x4] sm:$0xf]
    %v288 = vld [vmem:[#allocation8 + $0x8] sm:$0xf]
    %v289 = vld [vmem:[#allocation8 + $0xc] sm:$0xf]
    %v290 = vld [vmem:[#allocation8 + $0x10] sm:$0xf]
    %v291 = vld [vmem:[#allocation8 + $0x14] sm:$0xf]
    %v292 = vld [vmem:[#allocation8 + $0x18] sm:$0xf]
    %v293 = vld [vmem:[#allocation8 + $0x1c] sm:$0xf]
    %v294 = vld [vmem:[#allocation8 + $0x20] sm:$0xf]
    %v295 = vld [vmem:[#allocation8 + $0x24] sm:$0xf]
    %v296 = vld [vmem:[#allocation8 + $0x28] sm:$0xf]
    %v297 = vld [vmem:[#allocation8 + $0x2c] sm:$0xf]
    %v298 = vld [vmem:[#allocation8 + $0x30] sm:$0xf]
    %v299 = vld [vmem:[#allocation8 + $0x34] sm:$0xf]
    %v300 = vld [vmem:[#allocation8 + $0x38] sm:$0xf]
    %v301 = vld [vmem:[#allocation8 + $0x3c] sm:$0xf]
    %v302 = vld [vmem:[%s6] sm:$0x1]
    %v304 = vperm.slane %v302, 0
    %v322 = vunpack.c.l.b16 %v286
    %v323 = vunpack.c.l.b16 %v287
    %v324 = vunpack.c.l.b16 %v288
    %v325 = vunpack.c.l.b16 %v289
    %v326 = vunpack.c.l.b16 %v290
    %v327 = vunpack.c.l.b16 %v291
    %v328 = vunpack.c.l.b16 %v292
    %v329 = vunpack.c.l.b16 %v293
    %v330 = vunpack.c.l.b16 %v294
    %v331 = vunpack.c.l.b16 %v295
    %v332 = vunpack.c.l.b16 %v296
    %v333 = vunpack.c.l.b16 %v297
    %v334 = vunpack.c.l.b16 %v298
    %v335 = vunpack.c.l.b16 %v299
    %v336 = vunpack.c.l.b16 %v300
    %v337 = vunpack.c.l.b16 %v301
    %v338 = vpack.c.b16 %v323, %v322
    %v339 = vpack.c.b16 %v325, %v324
    %v340 = vpack.c.b16 %v327, %v326
    %v341 = vpack.c.b16 %v329, %v328
    %v342 = vpack.c.b16 %v331, %v330
    %v343 = vpack.c.b16 %v333, %v332
    %v344 = vpack.c.b16 %v335, %v334
    %v345 = vpack.c.b16 %v337, %v336
    %354 = vmatpush.bf16.msra.mxu0 %v345
    %355 = vmatpush.bf16.msra.mxu0 %v344
    %356 = vmatpush.bf16.msra.mxu0 %v343
    %357 = vmatpush.bf16.msra.mxu0 %v342
    %358 = vmatpush.bf16.msra.mxu0 %v341
    %359 = vmatpush.bf16.msra.mxu0 %v340
    %360 = vmatpush.bf16.msra.mxu0 %v339
    %361 = vmatpush.bf16.msra.mxu0 %v338
    %362 = vmatmul.bf16.gmra.mxu0 %v285
    %v363 = vpop.f32.mrf.mxu0
    %v364 = vadd.f32 %v304, %v363
    %v365 = vpop.f32.mrf.mxu0
    %v366 = vadd.f32 %v304, %v365
    %367 = vdwg.mxu0
    %v368 = vmax.f32 %v364, 0.0
    %v369 = vmax.f32 %v366, 0.0
    %v370 = vpack.c.bf16 %v369, %v368
    %v371 = vld [vmem:[#allocation10] sm:$0xf]
    %v372 = vld [vmem:[#allocation10 + $0x4] sm:$0xf]
    %v373 = vld [vmem:[#allocation10 + $0x8] sm:$0xf]
    %v374 = vld [vmem:[#allocation10 + $0xc] sm:$0xf]
    %v375 = vld [vmem:[#allocation10 + $0x10] sm:$0xf]
    %v376 = vld [vmem:[#allocation10 + $0x14] sm:$0xf]
    %v377 = vld [vmem:[#allocation10 + $0x18] sm:$0xf]
    %v378 = vld [vmem:[#allocation10 + $0x1c] sm:$0xf]
    %v379 = vld [vmem:[#allocation10 + $0x20] sm:$0xf]
    %v380 = vld [vmem:[#allocation10 + $0x24] sm:$0xf]
    %v381 = vld [vmem:[#allocation10 + $0x28] sm:$0xf]
    %v382 = vld [vmem:[#allocation10 + $0x2c] sm:$0xf]
    %v383 = vld [vmem:[#allocation10 + $0x30] sm:$0xf]
    %v384 = vld [vmem:[#allocation10 + $0x34] sm:$0xf]
    %v385 = vld [vmem:[#allocation10 + $0x38] sm:$0xf]
    %v386 = vld [vmem:[#allocation10 + $0x3c] sm:$0xf]
    %v403 = vunpack.c.l.b16 %v371
    %v404 = vunpack.c.l.b16 %v372
    %v405 = vunpack.c.l.b16 %v373
    %v406 = vunpack.c.l.b16 %v374
    %v407 = vunpack.c.l.b16 %v375
    %v408 = vunpack.c.l.b16 %v376
    %v409 = vunpack.c.l.b16 %v377
    %v410 = vunpack.c.l.b16 %v378
    %v411 = vunpack.c.l.b16 %v379
    %v412 = vunpack.c.l.b16 %v380
    %v413 = vunpack.c.l.b16 %v381
    %v414 = vunpack.c.l.b16 %v382
    %v415 = vunpack.c.l.b16 %v383
    %v416 = vunpack.c.l.b16 %v384
    %v417 = vunpack.c.l.b16 %v385
    %v418 = vunpack.c.l.b16 %v386
    %v419 = vpack.c.b16 %v404, %v403
    %v420 = vpack.c.b16 %v406, %v405
    %v421 = vpack.c.b16 %v408, %v407
    %v422 = vpack.c.b16 %v410, %v409
    %v423 = vpack.c.b16 %v412, %v411
    %v424 = vpack.c.b16 %v414, %v413
    %v425 = vpack.c.b16 %v416, %v415
    %v426 = vpack.c.b16 %v418, %v417
    %435 = vmatpush.bf16.msra.mxu0 %v426
    %436 = vmatpush.bf16.msra.mxu0 %v425
    %437 = vmatpush.bf16.msra.mxu0 %v424
    %438 = vmatpush.bf16.msra.mxu0 %v423
    %439 = vmatpush.bf16.msra.mxu0 %v422
    %440 = vmatpush.bf16.msra.mxu0 %v421
    %441 = vmatpush.bf16.msra.mxu0 %v420
    %442 = vmatpush.bf16.msra.mxu0 %v419
    %443 = vmatmul.bf16.gmra.mxu0 %v370
    %v444 = vpop.f32.mrf.mxu0
    %v445 = vadd.f32 0.0, %v444
    %v446 = vpop.f32.mrf.mxu0
    %v447 = vadd.f32 0.0, %v446
    %448 = vdwg.mxu0
    %449 = vst [vmem:[#allocation11] sm:$0xff] %v445
    %450 = vst [vmem:[#allocation11 + $0x8] sm:$0xff] %v447
    // Predicated region
    $region54: #{tpu_custom_call.1} parent=1 // pred_check
      _
    $region55: #{tpu_custom_call.1} parent=1 // pred_check_branch
      %452 = sbr.rel (0) target = $region57
    $region56: #{tpu_custom_call.1} parent=1 // pred_region
      %454 = vsyncadd [#allocation4], 0
      %s455 = sshll.u32 [#allocation11], 4
      %s456 = int_to_ptr.vmem [resolvable:$true] %s455
      %s457 = sshll.u32 %s8, 4
      %s458 = int_to_ptr.hbm [resolvable:$true] %s457
      %463 = dma.vmem_to_hbm [thread:$0]  %s456, 256, %s458, [#allocation4], 128, 128, 8
    $region57: #{tpu_custom_call.1} parent=1 // pred_fallthru
      _
    // Predicated region
    $region58: #{tpu_custom_call.1} parent=1 // pred_check
      _
    $region59: #{tpu_custom_call.1} parent=1 // pred_check_branch
      %465 = sbr.rel (0) target = $region61
    $region60: #{tpu_custom_call.1} parent=1 // pred_region
      %467 = dma.done [#allocation4], 256
    $region61: #{tpu_custom_call.1} parent=1 // pred_fallthru
      _
    %468 = vsyncpa [#allocation3], 1
    %469 = vsyncpa [#allocation6], 1
    %470 = vsyncpa [#allocation9], 1
    %471 = vsyncpa [#allocation4], 1

</llo_original>
